<compile_context>
chip_gen: v7x
topology: tpu7x:2x2x1
jax: 0.10.0
libtpu: 0.0.40
codegen_flags: <defaults>
</compile_context>

<pallas_src>
import functools

import jax
import jax.numpy as jnp
from jax.experimental import pallas as pl
from jax.experimental.pallas import tpu as pltpu

# Module hyper-parameters (PyTorch ctor defaults).
IN_FEAT = 28      # input_feature_size
C1 = 8            # conv1d out_channels (c1_spatial_kernelSize)
F2 = 16           # c2_numFilters
K2 = 9            # c2_temporal_kernelSize
S2 = 3            # c2_temporal_stride
H_LSTM = 32       # lstm_size
C2 = C1 * F2      # 128 == lstm_input_size
BN_EPS = 1e-5


# ----------------------------------------------------------------------------
# Single fused kernel: conv2d+BN+ReLU -> word pooling -> LSTM -> final hidden.
# ----------------------------------------------------------------------------
def fused_kernel(xp_ref, w2f_ref, cb_ref, pmat_ref, wih_ref, whh_ref, bl_ref,
                 act_ref, out_ref, *, B, NW):
    # xp_ref:   (B*T2, K2*C1) bf16   im2col patches of the conv1d+ReLU output
    # w2f_ref:  (K2*C1, C2)   bf16   temporal conv + BatchNorm folded
    # cb_ref:   (1, C2)       f32
    # pmat_ref: (NW*B, B*T2)  f32    word-avg-pool matrix, block-diag over B,
    #                                word-major rows (row = w*B + b)
    # wih_ref:  (C2, 4H) bf16  whh_ref: (H, 4H) bf16  bl_ref: (1, 4H) f32
    # act_ref:  (NW*B, 1) f32  1.0 while w < len[b] else 0.0 (packed freeze)
    # out_ref:  (B, H) f32
    H = H_LSTM

    # conv2d + BN + ReLU: one batched matmul over all (b, t2) rows.
    feat = jnp.maximum(
        jnp.dot(xp_ref[...], w2f_ref[...], preferred_element_type=jnp.float32)
        + cb_ref[...], 0.0)                                    # (B*T2, C2) f32
    # Word-level average pooling (block-diagonal over batch) as one matmul.
    pooled = jnp.dot(pmat_ref[...], feat,
                     preferred_element_type=jnp.float32)       # (NW*B, C2)
    # Hoisted LSTM input projection: all words of all batches in one matmul.
    gx = jnp.dot(pooled.astype(jnp.bfloat16), wih_ref[...],
                 preferred_element_type=jnp.float32) + bl_ref[...]  # (NW*B,4H)

    whh = whh_ref[...]                                         # (H, 4H) bf16
    act = act_ref[...]                                         # (NW*B, 1) f32

    # LSTM recurrence: batched over B, statically unrolled over NW words.
    h = jnp.zeros((B, H), jnp.float32)
    c = jnp.zeros((B, H), jnp.float32)
    for t in range(NW):                        # NW is tiny & static
        gx_t = gx[t * B:(t + 1) * B, :]        # contiguous (B, 4H) row slab
        gates = gx_t + jnp.dot(h.astype(jnp.bfloat16), whh,
                               preferred_element_type=jnp.float32)
        sig = jax.nn.sigmoid(gates)            # full-width nonlinearity,
        tnh = jnp.tanh(gates)                  # lane-slice afterwards
        i_g = sig[:, 0 * H:1 * H]
        f_g = sig[:, 1 * H:2 * H]
        g_g = tnh[:, 2 * H:3 * H]
        o_g = sig[:, 3 * H:4 * H]
        c_new = f_g * c + i_g * g_g
        h_new = o_g * jnp.tanh(c_new)
        a_t = act[t * B:(t + 1) * B, :] > 0.5  # (B, 1) freeze mask
        c = jnp.where(a_t, c_new, c)           # pack_padded semantics
        h = jnp.where(a_t, h_new, h)
    out_ref[...] = h.astype(out_ref.dtype)     # single final store == ht[-1]


# ----------------------------------------------------------------------------
# Parameters (PyTorch-equivalent) and one-time folding into matmul weights.
# ----------------------------------------------------------------------------
def init_params(key):
    ks = jax.random.split(key, 10)

    def rnd(k, shape, scale):
        return jax.random.normal(k, shape, jnp.float32) * scale

    return {
        # conv1d: PyTorch weight (C1, IN_FEAT, 1) stored transposed (IN_FEAT, C1)
        "conv1_w": rnd(ks[0], (IN_FEAT, C1), 1.0 / jnp.sqrt(IN_FEAT)),
        "conv1_b": rnd(ks[1], (C1,), 0.1),
        # conv2d: PyTorch weight (F2, 1, 1, K2) stored as (F2, K2)
        "conv2_w": rnd(ks[2], (F2, K2), 1.0 / jnp.sqrt(K2)),
        "conv2_b": rnd(ks[3], (F2,), 0.1),
        # BatchNorm2d (eval-mode running stats)
        "bn_gamma": 1.0 + 0.1 * jax.random.normal(ks[4], (F2,), jnp.float32),
        "bn_beta": rnd(ks[5], (F2,), 0.1),
        "bn_mean": rnd(ks[6], (F2,), 0.1),
        "bn_var": 0.5 + jax.random.uniform(ks[7], (F2,), jnp.float32),
        # LSTM: PyTorch W_ih (4H, C2) / W_hh (4H, H) stored transposed;
        # gate order [i, f, g, o] as in PyTorch.
        "lstm_wih": rnd(ks[8], (C2, 4 * H_LSTM), 1.0 / jnp.sqrt(C2)),
        "lstm_whh": rnd(ks[9], (H_LSTM, 4 * H_LSTM), 1.0 / jnp.sqrt(H_LSTM)),
        "lstm_bih": jnp.zeros((4 * H_LSTM,), jnp.float32),
        "lstm_bhh": jnp.zeros((4 * H_LSTM,), jnp.float32),
    }


def fold_params(p):
    """Fold conv2d + BatchNorm into one matmul weight; cast MXU weights bf16."""
    eye_h = jnp.eye(C1, dtype=jnp.float32)
    a = p["bn_gamma"] / jnp.sqrt(p["bn_var"] + BN_EPS)           # (F2,)
    w2a = p["conv2_w"] * a[:, None]                              # (F2, K2)
    #   w2f[k*C1 + h, f*C1 + h'] = w2a[f, k] * delta(h, h')
    w2f = jnp.einsum("fk,hj->khfj", w2a, eye_h).reshape(K2 * C1, C2)
    cb_f = p["conv2_b"] * a + (p["bn_beta"] - p["bn_mean"] * a)  # (F2,)
    cb = jnp.repeat(cb_f, C1).reshape(1, C2)                     # channel f*C1+h
    bl = (p["lstm_bih"] + p["lstm_bhh"]).reshape(1, 4 * H_LSTM)
    return {
        "conv1_w": p["conv1_w"], "conv1_b": p["conv1_b"],        # used in wrapper
        "w2f": w2f.astype(jnp.bfloat16), "cb": cb,
        "wih": p["lstm_wih"].astype(jnp.bfloat16),
        "whh": p["lstm_whh"].astype(jnp.bfloat16),
        "bl": bl,
    }


# ----------------------------------------------------------------------------
# Forward wrapper.
# ----------------------------------------------------------------------------
@jax.jit
def model_forward(folded, x, s, word_onset_idx, word_offset_idx):
    # x: (B, IN_FEAT, T) NCW as in PyTorch; s: (B,) word counts;
    # word_onset_idx / word_offset_idx: (B, NW) frame indices into the conv2d
    # output time axis.  Returns ht[-1] with shape (B, H_LSTM).
    B, _, T = x.shape
    T2 = (T - K2) // S2 + 1
    NW = word_onset_idx.shape[1]

    # conv1d (kernel size 1) + ReLU applied BEFORE im2col (per perf review:
    # removes the 9x-duplicated block-diagonal conv1 matmul in the kernel).
    y1 = jnp.maximum(
        jnp.einsum("bct,ch->bth", x, folded["conv1_w"]) + folded["conv1_b"],
        0.0)                                                     # (B, T, C1)

    # im2col of the conv1 output for the strided temporal conv.
    gidx = S2 * jnp.arange(T2)[:, None] + jnp.arange(K2)[None, :]   # (T2, K2)
    xp = y1[:, gidx, :].reshape(B, T2, K2 * C1)                  # patch = k*C1+h
    xp = xp.reshape(B * T2, K2 * C1).astype(jnp.bfloat16)        # row = b*T2+t2

    # Word average-pooling matrix over inclusive [onset, offset] windows,
    # block-diagonal over batch, word-major rows (row = w*B + b).
    # TODO(synk): utils.time_to_index / utils.avg_pooling were not provided in
    # the spec; onset/offset are interpreted directly as frame indices.
    on = jnp.clip(word_onset_idx, 0, T2 - 1)
    off = jnp.maximum(jnp.clip(word_offset_idx, 0, T2 - 1), on)
    t_iota = jnp.arange(T2)[None, None, :]
    mask = (t_iota >= on[:, :, None]) & (t_iota <= off[:, :, None])
    pmat_b = mask.astype(jnp.float32) / (off - on + 1).astype(jnp.float32)[:, :, None]
    pmat = jnp.einsum("bwt,bc->wbct", pmat_b,
                      jnp.eye(B, dtype=jnp.float32)).reshape(NW * B, B * T2)

    # Packed-sequence freeze mask, precomputed once (no per-step compare).
    act = (jnp.arange(NW)[:, None] < s.astype(jnp.int32)[None, :]
           ).astype(jnp.float32).reshape(NW * B, 1)

    args = (xp, folded["w2f"], folded["cb"], pmat, folded["wih"],
            folded["whh"], folded["bl"], act)

    flops = (2 * B * T2 * (K2 * C1) * C2          # conv2 + BN matmul
             + 2 * (NW * B) * (B * T2) * C2       # pooling matmul
             + 2 * (NW * B) * C2 * 4 * H_LSTM     # x @ W_ih
             + 2 * NW * B * H_LSTM * 4 * H_LSTM)  # h @ W_hh over recurrence
    transcendentals = NW * B * (2 * 4 * H_LSTM + H_LSTM)
    bytes_accessed = (sum(int(a.size) * a.dtype.itemsize for a in args)
                      + B * H_LSTM * 4)

    vmem = lambda: pl.BlockSpec(memory_space=pltpu.MemorySpace.VMEM)
    return pl.pallas_call(
        functools.partial(fused_kernel, B=B, NW=NW),
        out_shape=jax.ShapeDtypeStruct((B, H_LSTM), jnp.float32),
        in_specs=[vmem() for _ in range(len(args))],
        out_specs=vmem(),
        cost_estimate=pl.CostEstimate(flops=flops,
                                      transcendentals=transcendentals,
                                      bytes_accessed=bytes_accessed),
    )(*args)


if __name__ == "__main__":
    key = jax.random.PRNGKey(0)
    k_params, k_x = jax.random.split(key)

    B, T, NW = 2, 48, 5                    # T2 = (48 - 9)//3 + 1 = 14
    params = init_params(k_params)
    folded = fold_params(params)

    x = jax.random.normal(k_x, (B, IN_FEAT, T), jnp.float32)
    s = jnp.array([5, 3], dtype=jnp.int32)           # true word counts
    word_onset_idx = jnp.array([[0, 3, 6, 9, 12],
                                [0, 4, 8, 0, 0]], dtype=jnp.int32)
    word_offset_idx = jnp.array([[2, 5, 8, 11, 13],
                                 [3, 7, 12, 0, 0]], dtype=jnp.int32)

    out = model_forward(folded, x, s, word_onset_idx, word_offset_idx)
    jax.block_until_ready(out)

    assert out.shape == (B, H_LSTM)
    assert bool(jnp.all(jnp.isfinite(out)))
    print("KERNEL_OK")
</pallas_src>

<mosaic_0001>
module attributes {stable_mosaic.version = 11 : i64} {
  func.func @fused_kernel(%arg0: memref<28x72xbf16, #tpu.memory_space<vmem>>, %arg1: memref<72x128xbf16, #tpu.memory_space<vmem>>, %arg2: memref<1x128xf32, #tpu.memory_space<vmem>>, %arg3: memref<10x28xf32, #tpu.memory_space<vmem>>, %arg4: memref<128x128xbf16, #tpu.memory_space<vmem>>, %arg5: memref<32x128xbf16, #tpu.memory_space<vmem>>, %arg6: memref<1x128xf32, #tpu.memory_space<vmem>>, %arg7: memref<10x1xf32, #tpu.memory_space<vmem>>, %arg8: memref<2x32xf32, #tpu.memory_space<vmem>>) attributes {dimension_semantics = [], scalar_prefetch = 0 : i64, scratch_operands = 0 : i64, tpu.core_type = #tpu.core_type<tc>} {
    %c0 = arith.constant 0 : index
    %c0_0 = arith.constant 0 : index
    %0 = vector.load %arg0[%c0, %c0_0] : memref<28x72xbf16, #tpu.memory_space<vmem>>, vector<28x72xbf16>
    %c0_1 = arith.constant 0 : index
    %c0_2 = arith.constant 0 : index
    %1 = vector.load %arg1[%c0_1, %c0_2] : memref<72x128xbf16, #tpu.memory_space<vmem>>, vector<72x128xbf16>
    %cst = arith.constant dense<0.000000e+00> : vector<28x128xf32>
    %2 = tpu.matmul %0, %1, %cst {dimension_numbers = #tpu.dot_dimension_numbers<[1], [0], [0], [1], [0, 0, 1, 1], [], []>} : vector<28x72xbf16>, vector<72x128xbf16>, vector<28x128xf32> -> vector<28x128xf32>
    %c0_3 = arith.constant 0 : index
    %c0_4 = arith.constant 0 : index
    %3 = vector.load %arg2[%c0_3, %c0_4] : memref<1x128xf32, #tpu.memory_space<vmem>>, vector<1x128xf32>
    %4 = vector.broadcast %3 : vector<1x128xf32> to vector<28x128xf32>
    %5 = arith.addf %2, %4 : vector<28x128xf32>
    %cst_5 = arith.constant 0.000000e+00 : f32
    %6 = vector.broadcast %cst_5 : f32 to vector<28x128xf32>
    %7 = arith.maximumf %5, %6 : vector<28x128xf32>
    %c0_6 = arith.constant 0 : index
    %c0_7 = arith.constant 0 : index
    %8 = vector.load %arg3[%c0_6, %c0_7] : memref<10x28xf32, #tpu.memory_space<vmem>>, vector<10x28xf32>
    %cst_8 = arith.constant dense<0.000000e+00> : vector<10x128xf32>
    %9 = tpu.matmul %8, %7, %cst_8 {dimension_numbers = #tpu.dot_dimension_numbers<[1], [0], [0], [1], [0, 0, 1, 1], [], []>} : vector<10x28xf32>, vector<28x128xf32>, vector<10x128xf32> -> vector<10x128xf32>
    %10 = arith.truncf %9 : vector<10x128xf32> to vector<10x128xbf16>
    %c0_9 = arith.constant 0 : index
    %c0_10 = arith.constant 0 : index
    %11 = vector.load %arg4[%c0_9, %c0_10] : memref<128x128xbf16, #tpu.memory_space<vmem>>, vector<128x128xbf16>
    %cst_11 = arith.constant dense<0.000000e+00> : vector<10x128xf32>
    %12 = tpu.matmul %10, %11, %cst_11 {dimension_numbers = #tpu.dot_dimension_numbers<[1], [0], [0], [1], [0, 0, 1, 1], [], []>} : vector<10x128xbf16>, vector<128x128xbf16>, vector<10x128xf32> -> vector<10x128xf32>
    %c0_12 = arith.constant 0 : index
    %c0_13 = arith.constant 0 : index
    %13 = vector.load %arg6[%c0_12, %c0_13] : memref<1x128xf32, #tpu.memory_space<vmem>>, vector<1x128xf32>
    %14 = vector.broadcast %13 : vector<1x128xf32> to vector<10x128xf32>
    %15 = arith.addf %12, %14 : vector<10x128xf32>
    %c0_14 = arith.constant 0 : index
    %c0_15 = arith.constant 0 : index
    %16 = vector.load %arg5[%c0_14, %c0_15] : memref<32x128xbf16, #tpu.memory_space<vmem>>, vector<32x128xbf16>
    %c0_16 = arith.constant 0 : index
    %c0_17 = arith.constant 0 : index
    %17 = vector.load %arg7[%c0_16, %c0_17] : memref<10x1xf32, #tpu.memory_space<vmem>>, vector<10x1xf32>
    %cst_18 = arith.constant 0.000000e+00 : f32
    %18 = vector.broadcast %cst_18 : f32 to vector<2x32xf32>
    %cst_19 = arith.constant 0.000000e+00 : f32
    %19 = vector.broadcast %cst_19 : f32 to vector<2x32xf32>
    %20 = vector.extract_strided_slice %15 {offsets = [0, 0], sizes = [2, 128], strides = [1, 1]} : vector<10x128xf32> to vector<2x128xf32>
    %21 = arith.truncf %18 : vector<2x32xf32> to vector<2x32xbf16>
    %cst_20 = arith.constant dense<0.000000e+00> : vector<2x128xf32>
    %22 = tpu.matmul %21, %16, %cst_20 {dimension_numbers = #tpu.dot_dimension_numbers<[1], [0], [0], [1], [0, 0, 1, 1], [], []>} : vector<2x32xbf16>, vector<32x128xbf16>, vector<2x128xf32> -> vector<2x128xf32>
    %23 = arith.addf %20, %22 : vector<2x128xf32>
    %24 = arith.negf %23 : vector<2x128xf32>
    %25 = math.exp %24 : vector<2x128xf32>
    %cst_21 = arith.constant 1.000000e+00 : f32
    %26 = vector.broadcast %cst_21 : f32 to vector<2x128xf32>
    %27 = arith.addf %26, %25 : vector<2x128xf32>
    %28 = arith.divf %26, %27 : vector<2x128xf32>
    %29 = math.tanh %23 : vector<2x128xf32>
    %30 = vector.extract_strided_slice %28 {offsets = [0, 0], sizes = [2, 32], strides = [1, 1]} : vector<2x128xf32> to vector<2x32xf32>
    %31 = vector.extract_strided_slice %28 {offsets = [0, 32], sizes = [2, 32], strides = [1, 1]} : vector<2x128xf32> to vector<2x32xf32>
    %32 = vector.extract_strided_slice %29 {offsets = [0, 64], sizes = [2, 32], strides = [1, 1]} : vector<2x128xf32> to vector<2x32xf32>
    %33 = vector.extract_strided_slice %28 {offsets = [0, 96], sizes = [2, 32], strides = [1, 1]} : vector<2x128xf32> to vector<2x32xf32>
    %34 = arith.mulf %31, %19 : vector<2x32xf32>
    %35 = arith.mulf %30, %32 : vector<2x32xf32>
    %36 = arith.addf %34, %35 : vector<2x32xf32>
    %37 = math.tanh %36 : vector<2x32xf32>
    %38 = arith.mulf %33, %37 : vector<2x32xf32>
    %39 = vector.extract_strided_slice %17 {offsets = [0, 0], sizes = [2, 1], strides = [1, 1]} : vector<10x1xf32> to vector<2x1xf32>
    %cst_22 = arith.constant 5.000000e-01 : f32
    %40 = vector.broadcast %cst_22 : f32 to vector<2x1xf32>
    %41 = arith.cmpf ogt, %39, %40 : vector<2x1xf32>
    %42 = vector.shape_cast %41 : vector<2x1xi1> to vector<2x1xi1>
    %43 = vector.broadcast %42 : vector<2x1xi1> to vector<2x32xi1>
    %44 = arith.select %43, %36, %19 : vector<2x32xi1>, vector<2x32xf32>
    %45 = vector.shape_cast %41 : vector<2x1xi1> to vector<2x1xi1>
    %46 = vector.broadcast %45 : vector<2x1xi1> to vector<2x32xi1>
    %47 = arith.select %46, %38, %18 : vector<2x32xi1>, vector<2x32xf32>
    %48 = vector.extract_strided_slice %15 {offsets = [2, 0], sizes = [2, 128], strides = [1, 1]} : vector<10x128xf32> to vector<2x128xf32>
    %49 = arith.truncf %47 : vector<2x32xf32> to vector<2x32xbf16>
    %cst_23 = arith.constant dense<0.000000e+00> : vector<2x128xf32>
    %50 = tpu.matmul %49, %16, %cst_23 {dimension_numbers = #tpu.dot_dimension_numbers<[1], [0], [0], [1], [0, 0, 1, 1], [], []>} : vector<2x32xbf16>, vector<32x128xbf16>, vector<2x128xf32> -> vector<2x128xf32>
    %51 = arith.addf %48, %50 : vector<2x128xf32>
    %52 = arith.negf %51 : vector<2x128xf32>
    %53 = math.exp %52 : vector<2x128xf32>
    %cst_24 = arith.constant 1.000000e+00 : f32
    %54 = vector.broadcast %cst_24 : f32 to vector<2x128xf32>
    %55 = arith.addf %54, %53 : vector<2x128xf32>
    %56 = arith.divf %54, %55 : vector<2x128xf32>
    %57 = math.tanh %51 : vector<2x128xf32>
    %58 = vector.extract_strided_slice %56 {offsets = [0, 0], sizes = [2, 32], strides = [1, 1]} : vector<2x128xf32> to vector<2x32xf32>
    %59 = vector.extract_strided_slice %56 {offsets = [0, 32], sizes = [2, 32], strides = [1, 1]} : vector<2x128xf32> to vector<2x32xf32>
    %60 = vector.extract_strided_slice %57 {offsets = [0, 64], sizes = [2, 32], strides = [1, 1]} : vector<2x128xf32> to vector<2x32xf32>
    %61 = vector.extract_strided_slice %56 {offsets = [0, 96], sizes = [2, 32], strides = [1, 1]} : vector<2x128xf32> to vector<2x32xf32>
    %62 = arith.mulf %59, %44 : vector<2x32xf32>
    %63 = arith.mulf %58, %60 : vector<2x32xf32>
    %64 = arith.addf %62, %63 : vector<2x32xf32>
    %65 = math.tanh %64 : vector<2x32xf32>
    %66 = arith.mulf %61, %65 : vector<2x32xf32>
    %67 = vector.extract_strided_slice %17 {offsets = [2, 0], sizes = [2, 1], strides = [1, 1]} : vector<10x1xf32> to vector<2x1xf32>
    %cst_25 = arith.constant 5.000000e-01 : f32
    %68 = vector.broadcast %cst_25 : f32 to vector<2x1xf32>
    %69 = arith.cmpf ogt, %67, %68 : vector<2x1xf32>
    %70 = vector.shape_cast %69 : vector<2x1xi1> to vector<2x1xi1>
    %71 = vector.broadcast %70 : vector<2x1xi1> to vector<2x32xi1>
    %72 = arith.select %71, %64, %44 : vector<2x32xi1>, vector<2x32xf32>
    %73 = vector.shape_cast %69 : vector<2x1xi1> to vector<2x1xi1>
    %74 = vector.broadcast %73 : vector<2x1xi1> to vector<2x32xi1>
    %75 = arith.select %74, %66, %47 : vector<2x32xi1>, vector<2x32xf32>
    %76 = vector.extract_strided_slice %15 {offsets = [4, 0], sizes = [2, 128], strides = [1, 1]} : vector<10x128xf32> to vector<2x128xf32>
    %77 = arith.truncf %75 : vector<2x32xf32> to vector<2x32xbf16>
    %cst_26 = arith.constant dense<0.000000e+00> : vector<2x128xf32>
    %78 = tpu.matmul %77, %16, %cst_26 {dimension_numbers = #tpu.dot_dimension_numbers<[1], [0], [0], [1], [0, 0, 1, 1], [], []>} : vector<2x32xbf16>, vector<32x128xbf16>, vector<2x128xf32> -> vector<2x128xf32>
    %79 = arith.addf %76, %78 : vector<2x128xf32>
    %80 = arith.negf %79 : vector<2x128xf32>
    %81 = math.exp %80 : vector<2x128xf32>
    %cst_27 = arith.constant 1.000000e+00 : f32
    %82 = vector.broadcast %cst_27 : f32 to vector<2x128xf32>
    %83 = arith.addf %82, %81 : vector<2x128xf32>
    %84 = arith.divf %82, %83 : vector<2x128xf32>
    %85 = math.tanh %79 : vector<2x128xf32>
    %86 = vector.extract_strided_slice %84 {offsets = [0, 0], sizes = [2, 32], strides = [1, 1]} : vector<2x128xf32> to vector<2x32xf32>
    %87 = vector.extract_strided_slice %84 {offsets = [0, 32], sizes = [2, 32], strides = [1, 1]} : vector<2x128xf32> to vector<2x32xf32>
    %88 = vector.extract_strided_slice %85 {offsets = [0, 64], sizes = [2, 32], strides = [1, 1]} : vector<2x128xf32> to vector<2x32xf32>
    %89 = vector.extract_strided_slice %84 {offsets = [0, 96], sizes = [2, 32], strides = [1, 1]} : vector<2x128xf32> to vector<2x32xf32>
    %90 = arith.mulf %87, %72 : vector<2x32xf32>
    %91 = arith.mulf %86, %88 : vector<2x32xf32>
    %92 = arith.addf %90, %91 : vector<2x32xf32>
    %93 = math.tanh %92 : vector<2x32xf32>
    %94 = arith.mulf %89, %93 : vector<2x32xf32>
    %95 = vector.extract_strided_slice %17 {offsets = [4, 0], sizes = [2, 1], strides = [1, 1]} : vector<10x1xf32> to vector<2x1xf32>
    %cst_28 = arith.constant 5.000000e-01 : f32
    %96 = vector.broadcast %cst_28 : f32 to vector<2x1xf32>
    %97 = arith.cmpf ogt, %95, %96 : vector<2x1xf32>
    %98 = vector.shape_cast %97 : vector<2x1xi1> to vector<2x1xi1>
    %99 = vector.broadcast %98 : vector<2x1xi1> to vector<2x32xi1>
    %100 = arith.select %99, %92, %72 : vector<2x32xi1>, vector<2x32xf32>
    %101 = vector.shape_cast %97 : vector<2x1xi1> to vector<2x1xi1>
    %102 = vector.broadcast %101 : vector<2x1xi1> to vector<2x32xi1>
    %103 = arith.select %102, %94, %75 : vector<2x32xi1>, vector<2x32xf32>
    %104 = vector.extract_strided_slice %15 {offsets = [6, 0], sizes = [2, 128], strides = [1, 1]} : vector<10x128xf32> to vector<2x128xf32>
    %105 = arith.truncf %103 : vector<2x32xf32> to vector<2x32xbf16>
    %cst_29 = arith.constant dense<0.000000e+00> : vector<2x128xf32>
    %106 = tpu.matmul %105, %16, %cst_29 {dimension_numbers = #tpu.dot_dimension_numbers<[1], [0], [0], [1], [0, 0, 1, 1], [], []>} : vector<2x32xbf16>, vector<32x128xbf16>, vector<2x128xf32> -> vector<2x128xf32>
    %107 = arith.addf %104, %106 : vector<2x128xf32>
    %108 = arith.negf %107 : vector<2x128xf32>
    %109 = math.exp %108 : vector<2x128xf32>
    %cst_30 = arith.constant 1.000000e+00 : f32
    %110 = vector.broadcast %cst_30 : f32 to vector<2x128xf32>
    %111 = arith.addf %110, %109 : vector<2x128xf32>
    %112 = arith.divf %110, %111 : vector<2x128xf32>
    %113 = math.tanh %107 : vector<2x128xf32>
    %114 = vector.extract_strided_slice %112 {offsets = [0, 0], sizes = [2, 32], strides = [1, 1]} : vector<2x128xf32> to vector<2x32xf32>
    %115 = vector.extract_strided_slice %112 {offsets = [0, 32], sizes = [2, 32], strides = [1, 1]} : vector<2x128xf32> to vector<2x32xf32>
    %116 = vector.extract_strided_slice %113 {offsets = [0, 64], sizes = [2, 32], strides = [1, 1]} : vector<2x128xf32> to vector<2x32xf32>
    %117 = vector.extract_strided_slice %112 {offsets = [0, 96], sizes = [2, 32], strides = [1, 1]} : vector<2x128xf32> to vector<2x32xf32>
    %118 = arith.mulf %115, %100 : vector<2x32xf32>
    %119 = arith.mulf %114, %116 : vector<2x32xf32>
    %120 = arith.addf %118, %119 : vector<2x32xf32>
    %121 = math.tanh %120 : vector<2x32xf32>
    %122 = arith.mulf %117, %121 : vector<2x32xf32>
    %123 = vector.extract_strided_slice %17 {offsets = [6, 0], sizes = [2, 1], strides = [1, 1]} : vector<10x1xf32> to vector<2x1xf32>
    %cst_31 = arith.constant 5.000000e-01 : f32
    %124 = vector.broadcast %cst_31 : f32 to vector<2x1xf32>
    %125 = arith.cmpf ogt, %123, %124 : vector<2x1xf32>
    %126 = vector.shape_cast %125 : vector<2x1xi1> to vector<2x1xi1>
    %127 = vector.broadcast %126 : vector<2x1xi1> to vector<2x32xi1>
    %128 = arith.select %127, %120, %100 : vector<2x32xi1>, vector<2x32xf32>
    %129 = vector.shape_cast %125 : vector<2x1xi1> to vector<2x1xi1>
    %130 = vector.broadcast %129 : vector<2x1xi1> to vector<2x32xi1>
    %131 = arith.select %130, %122, %103 : vector<2x32xi1>, vector<2x32xf32>
    %132 = vector.extract_strided_slice %15 {offsets = [8, 0], sizes = [2, 128], strides = [1, 1]} : vector<10x128xf32> to vector<2x128xf32>
    %133 = arith.truncf %131 : vector<2x32xf32> to vector<2x32xbf16>
    %cst_32 = arith.constant dense<0.000000e+00> : vector<2x128xf32>
    %134 = tpu.matmul %133, %16, %cst_32 {dimension_numbers = #tpu.dot_dimension_numbers<[1], [0], [0], [1], [0, 0, 1, 1], [], []>} : vector<2x32xbf16>, vector<32x128xbf16>, vector<2x128xf32> -> vector<2x128xf32>
    %135 = arith.addf %132, %134 : vector<2x128xf32>
    %136 = arith.negf %135 : vector<2x128xf32>
    %137 = math.exp %136 : vector<2x128xf32>
    %cst_33 = arith.constant 1.000000e+00 : f32
    %138 = vector.broadcast %cst_33 : f32 to vector<2x128xf32>
    %139 = arith.addf %138, %137 : vector<2x128xf32>
    %140 = arith.divf %138, %139 : vector<2x128xf32>
    %141 = math.tanh %135 : vector<2x128xf32>
    %142 = vector.extract_strided_slice %140 {offsets = [0, 0], sizes = [2, 32], strides = [1, 1]} : vector<2x128xf32> to vector<2x32xf32>
    %143 = vector.extract_strided_slice %140 {offsets = [0, 32], sizes = [2, 32], strides = [1, 1]} : vector<2x128xf32> to vector<2x32xf32>
    %144 = vector.extract_strided_slice %141 {offsets = [0, 64], sizes = [2, 32], strides = [1, 1]} : vector<2x128xf32> to vector<2x32xf32>
    %145 = vector.extract_strided_slice %140 {offsets = [0, 96], sizes = [2, 32], strides = [1, 1]} : vector<2x128xf32> to vector<2x32xf32>
    %146 = arith.mulf %143, %128 : vector<2x32xf32>
    %147 = arith.mulf %142, %144 : vector<2x32xf32>
    %148 = arith.addf %146, %147 : vector<2x32xf32>
    %149 = math.tanh %148 : vector<2x32xf32>
    %150 = arith.mulf %145, %149 : vector<2x32xf32>
    %151 = vector.extract_strided_slice %17 {offsets = [8, 0], sizes = [2, 1], strides = [1, 1]} : vector<10x1xf32> to vector<2x1xf32>
    %cst_34 = arith.constant 5.000000e-01 : f32
    %152 = vector.broadcast %cst_34 : f32 to vector<2x1xf32>
    %153 = arith.cmpf ogt, %151, %152 : vector<2x1xf32>
    %154 = vector.shape_cast %153 : vector<2x1xi1> to vector<2x1xi1>
    %155 = vector.broadcast %154 : vector<2x1xi1> to vector<2x32xi1>
    %156 = arith.select %155, %150, %131 : vector<2x32xi1>, vector<2x32xf32>
    %c0_35 = arith.constant 0 : index
    %c0_36 = arith.constant 0 : index
    %157 = vector.load %arg8[%c0_35, %c0_36] : memref<2x32xf32, #tpu.memory_space<vmem>>, vector<2x32xf32>
    tpu.vector_store %arg8[%c0_35, %c0_36], %156 {strides = array<i32>} : memref<2x32xf32, #tpu.memory_space<vmem>>, vector<2x32xf32>,
    return
  }
}

</mosaic_0001>

<llo_original>
// kernel: model_forward.1
$region0: #{model_forward.1}
  #allocation0 [shape = 'u32[]', space=smem, size = 0x4, offset = 0x4, fixed_abs, tag = 'smem constant byte address 0x4 - core index']
  #allocation1 [shape = 'u32[144,128]{1,0:T(1,128)}', space=vmem, size = 0x12000, scoped, tag = 'internal scratch']
  %s0 = inlined_call_operand.vmem [shape: bf16[28,72], index: 0, kind: input, shape index: {}]
  %s1 = inlined_call_operand.vmem [shape: bf16[72,128], index: 1, kind: input, shape index: {}]
  %s2 = inlined_call_operand.vmem [shape: f32[1,128], index: 2, kind: input, shape index: {}]
  %s3 = inlined_call_operand.vmem [shape: f32[10,28], index: 3, kind: input, shape index: {}]
  %s4 = inlined_call_operand.vmem [shape: bf16[128,128], index: 4, kind: input, shape index: {}]
  %s5 = inlined_call_operand.vmem [shape: bf16[32,128], index: 5, kind: input, shape index: {}]
  %s6 = inlined_call_operand.vmem [shape: f32[1,128], index: 6, kind: input, shape index: {}]
  %s7 = inlined_call_operand.vmem [shape: f32[10,1], index: 7, kind: input, shape index: {}]
  %s8 = inlined_call_operand.hbm [shape: f32[2,32], index: 8, kind: output, shape index: {}]
  %s9 = sld [smem:[#allocation0]]
  $region42: #{model_forward.1} parent=0
    _
  %s11 = ssub.s32 1, %s9
  %s12 = scalar_select 0, %s11, %s9
  $region1: #{model_forward.1} parent=0
    #allocation2 [shape = 'u8[1024]{0}', space=vmem, size = 0x400, scoped, tag = 'output window, operand 0, single buffered']
    #allocation3 [shape = 's32[1]{0}', space=sflag, size = 0x4, scoped, tag = 'scoped memory for model_forward.1']
    %13 = vsyncpa [#allocation3], 0
    // Predicated region
    $region2: #{model_forward.1} parent=1 // pred_check
      _
    $region3: #{model_forward.1} parent=1 // pred_check_branch
      %15 = sbr.rel (0) target = $region5
    $region4: #{model_forward.1} parent=1 // pred_region
      _
    $region5: #{model_forward.1} parent=1 // pred_fallthru
      _
    // Predicated region
    $region6: #{model_forward.1} parent=1 // pred_check
      _
    $region7: #{model_forward.1} parent=1 // pred_check_branch
      %17 = sbr.rel (0) target = $region9
    $region8: #{model_forward.1} parent=1 // pred_region
      _
    $region9: #{model_forward.1} parent=1 // pred_fallthru
      _
    // Predicated region
    $region10: #{model_forward.1} parent=1 // pred_check
      _
    $region11: #{model_forward.1} parent=1 // pred_check_branch
      %19 = sbr.rel (0) target = $region13
    $region12: #{model_forward.1} parent=1 // pred_region
      _
    $region13: #{model_forward.1} parent=1 // pred_fallthru
      _
    // Predicated region
    $region14: #{model_forward.1} parent=1 // pred_check
      _
    $region15: #{model_forward.1} parent=1 // pred_check_branch
      %21 = sbr.rel (0) target = $region17
    $region16: #{model_forward.1} parent=1 // pred_region
      _
    $region17: #{model_forward.1} parent=1 // pred_fallthru
      _
    // Predicated region
    $region18: #{model_forward.1} parent=1 // pred_check
      _
    $region19: #{model_forward.1} parent=1 // pred_check_branch
      %23 = sbr.rel (0) target = $region21
    $region20: #{model_forward.1} parent=1 // pred_region
      _
    $region21: #{model_forward.1} parent=1 // pred_fallthru
      _
    // Predicated region
    $region22: #{model_forward.1} parent=1 // pred_check
      _
    $region23: #{model_forward.1} parent=1 // pred_check_branch
      %25 = sbr.rel (0) target = $region25
    $region24: #{model_forward.1} parent=1 // pred_region
      _
    $region25: #{model_forward.1} parent=1 // pred_fallthru
      _
    // Predicated region
    $region26: #{model_forward.1} parent=1 // pred_check
      _
    $region27: #{model_forward.1} parent=1 // pred_check_branch
      %27 = sbr.rel (0) target = $region29
    $region28: #{model_forward.1} parent=1 // pred_region
      _
    $region29: #{model_forward.1} parent=1 // pred_fallthru
      _
    // Predicated region
    $region30: #{model_forward.1} parent=1 // pred_check
      _
    $region31: #{model_forward.1} parent=1 // pred_check_branch
      %29 = sbr.rel (0) target = $region33
    $region32: #{model_forward.1} parent=1 // pred_region
      _
    $region33: #{model_forward.1} parent=1 // pred_fallthru
      _
    %v31 = vld [vmem:[%s0] sm:$0xf]
    %v32 = vld [vmem:[%s0 + $0x4] sm:$0xf]
    %v33 = vld [vmem:[%s0 + $0x8] sm:$0xf]
    %v34 = vld [vmem:[%s0 + $0xc] sm:$0x3]
    %v35 = vld [vmem:[%s1] sm:$0xf]
    %v36 = vld [vmem:[%s1 + $0x4] sm:$0xf]
    %v37 = vld [vmem:[%s1 + $0x8] sm:$0xf]
    %v38 = vld [vmem:[%s1 + $0xc] sm:$0xf]
    %v39 = vld [vmem:[%s1 + $0x10] sm:$0xf]
    %v40 = vld [vmem:[%s1 + $0x14] sm:$0xf]
    %v41 = vld [vmem:[%s1 + $0x18] sm:$0xf]
    %v42 = vld [vmem:[%s1 + $0x1c] sm:$0xf]
    %v43 = vld [vmem:[%s1 + $0x20] sm:$0xf]
    %v44 = vld [vmem:[%s2] sm:$0x1]
    %v46 = vlaneseq
    %v47 = vshrl.u32 %v46, 7
    %v48 = vsub.s32 0, %v47
    %v49 = vrot.slane %v44, %v48
    %v55 = vunpack.c.l.b16 %v31
    %v56 = vunpack.c.l.b16 %v32
    %v57 = vunpack.c.l.b16 %v33
    %v58 = vunpack.c.l.b16 %v34
    %v59 = vpack.c.b16 %v56, %v55
    %v60 = vpack.c.b16 %v58, %v57
    %v70 = vunpack.c.l.b16 %v35
    %v71 = vunpack.c.l.b16 %v36
    %v72 = vunpack.c.l.b16 %v37
    %v73 = vunpack.c.l.b16 %v38
    %v74 = vunpack.c.l.b16 %v39
    %v75 = vunpack.c.l.b16 %v40
    %v76 = vunpack.c.l.b16 %v41
    %v77 = vunpack.c.l.b16 %v42
    %v78 = vunpack.c.l.b16 %v43
    %v79 = vpack.c.b16 %v71, %v70
    %v80 = vpack.c.b16 %v73, %v72
    %v81 = vpack.c.b16 %v75, %v74
    %v82 = vpack.c.b16 %v77, %v76
    %v83 = vpack.c.b16 %v78, %v78
    %vm88 = vcmask 588800
    %v90 = vsel %vm88, %v59, 0
    %v93 = vsel %vm88, %v60, 0
    %vm95 = vcmask 1043456
    %v97 = vsel %vm95, %v83, 0
    %99 = vmatprep.subr.bf16.mxu0 0
    %100 = vmatpush1.bf16.msra.mxu0 %v79
    %101 = vmatprep.subr.bf16.mxu0 0
    %102 = vmatpush1.bf16.msra.mxu0 %v80
    %103 = vmatprep.subr.bf16.mxu0 0
    %104 = vmatpush1.bf16.msra.mxu0 %v81
    %105 = vmatprep.subr.bf16.mxu0 0
    %106 = vmatpush1.bf16.msra.mxu0 %v82
    %107 = vmatprep.subr.bf16.mxu0 0
    %108 = vmatpush1.bf16.msra.mxu0 %v97
    %109 = vmatprep.subr.bf16.mxu0 0
    %110 = vmatpush1.bf16.msra.mxu0 0
    %111 = vmatprep.subr.bf16.mxu0 0
    %112 = vmatpush1.bf16.msra.mxu0 0
    %113 = vmatprep.subr.bf16.mxu0 0
    %114 = vmatpush1.bf16.msra.mxu0 0
    %115 = vmatprep.subr.bf16.mxu0 0
    %116 = vmatpush1.bf16.msra.mxu0 0
    %117 = vmatprep.subr.bf16.mxu0 0
    %118 = vmatpush1.bf16.msra.mxu0 0
    %119 = vmatprep.subr.bf16.mxu0 0
    %120 = vmatpush1.bf16.msra.mxu0 0
    %121 = vmatprep.subr.bf16.mxu0 0
    %122 = vmatpush1.bf16.msra.mxu0 0
    %123 = vmatprep.subr.bf16.mxu0 0
    %124 = vmatpush1.bf16.msra.mxu0 0
    %125 = vmatprep.subr.bf16.mxu0 0
    %126 = vmatpush1.bf16.msra.mxu0 0
    %127 = vmatprep.subr.bf16.mxu0 0
    %128 = vmatpush1.bf16.msra.mxu0 0
    %129 = vmatprep.subr.bf16.mxu0 0
    %130 = vmatpush1.bf16.msra.mxu0 0
    %131 = vmatprep.mubr.bf16.mxu0 0
    %132 = vmatmul.mubr.bf16.gmra.mrb[0].mxu0 %v90
    %v133 = vpop.f32.mrb[0].mxu0
    %v134 = vadd.f32 %v49, %v133
    %v135 = vpop.f32.mrb[0].mxu0
    %v136 = vpop.f32.mrb[0].mxu0
    %v137 = vadd.f32 %v49, %v136
    %v138 = vpop.f32.mrb[0].mxu0
    %139 = vmatprep.mubr.bf16.mxu0 0
    %140 = vmatmul.mubr.bf16.gmra.mrb[0].mxu0 %v93
    %v141 = vpop.f32.mrb[0].mxu0
    %v142 = vadd.f32 %v49, %v141
    %v143 = vpop.f32.mrb[0].mxu0
    %v144 = vpop.f32.mrb[0].mxu0
    %v145 = vadd.f32 %v49, %v144
    %v146 = vpop.f32.mrb[0].mxu0
    %147 = vdwg.mxu0
    %v148 = vmax.f32 %v134, 0.0
    %v149 = vmax.f32 %v137, 0.0
    %v150 = vmax.f32 %v142, 0.0
    %v151 = vmax.f32 %v145, 0.0
    %v152 = vld [vmem:[%s3] sm:$0xff]
    %v153 = vld [vmem:[%s3 + $0x8] sm:$0x3]
    %vm154 = vcmask 228352
    %v156 = vsel %vm154, %v152, 0
    %v159 = vsel %vm154, %v153, 0
    %v162 = vsel %vm95, %v151, 0
    %164 = vmatprep.subr.mxu0 0.0
    %165 = vmatpush1.msra.mxu0 %v148
    %166 = vmatprep.subr.mxu0 0.0
    %167 = vmatpush1.msra.mxu0 %v149
    %168 = vmatprep.subr.mxu0 0.0
    %169 = vmatpush1.msra.mxu0 %v150
    %170 = vmatprep.subr.mxu0 0.0
    %171 = vmatpush1.msra.mxu0 %v162
    %172 = vmatprep.subr.mxu0 0.0
    %173 = vmatpush1.msra.mxu0 0.0
    %174 = vmatprep.subr.mxu0 0.0
    %175 = vmatpush1.msra.mxu0 0.0
    %176 = vmatprep.subr.mxu0 0.0
    %177 = vmatpush1.msra.mxu0 0.0
    %178 = vmatprep.subr.mxu0 0.0
    %179 = vmatpush1.msra.mxu0 0.0
    %180 = vmatprep.subr.mxu0 0.0
    %181 = vmatpush1.msra.mxu0 0.0
    %182 = vmatprep.subr.mxu0 0.0
    %183 = vmatpush1.msra.mxu0 0.0
    %184 = vmatprep.subr.mxu0 0.0
    %185 = vmatpush1.msra.mxu0 0.0
    %186 = vmatprep.subr.mxu0 0.0
    %187 = vmatpush1.msra.mxu0 0.0
    %188 = vmatprep.subr.mxu0 0.0
    %189 = vmatpush1.msra.mxu0 0.0
    %190 = vmatprep.subr.mxu0 0.0
    %191 = vmatpush1.msra.mxu0 0.0
    %192 = vmatprep.subr.mxu0 0.0
    %193 = vmatpush1.msra.mxu0 0.0
    %194 = vmatprep.subr.mxu0 0.0
    %195 = vmatpush1.msra.mxu0 0.0
    %196 = vmatprep.subr.mxu0 0.0
    %197 = vmatpush1.msra.mxu0 0.0
    %198 = vmatprep.subr.mxu0 0.0
    %199 = vmatpush1.msra.mxu0 0.0
    %200 = vmatprep.subr.mxu0 0.0
    %201 = vmatpush1.msra.mxu0 0.0
    %202 = vmatprep.subr.mxu0 0.0
    %203 = vmatpush1.msra.mxu0 0.0
    %204 = vmatprep.subr.mxu0 0.0
    %205 = vmatpush1.msra.mxu0 0.0
    %206 = vmatprep.subr.mxu0 0.0
    %207 = vmatpush1.msra.mxu0 0.0
    %208 = vmatprep.subr.mxu0 0.0
    %209 = vmatpush1.msra.mxu0 0.0
    %210 = vmatprep.subr.mxu0 0.0
    %211 = vmatpush1.msra.mxu0 0.0
    %212 = vmatprep.subr.mxu0 0.0
    %213 = vmatpush1.msra.mxu0 0.0
    %214 = vmatprep.subr.mxu0 0.0
    %215 = vmatpush1.msra.mxu0 0.0
    %216 = vmatprep.subr.mxu0 0.0
    %217 = vmatpush1.msra.mxu0 0.0
    %218 = vmatprep.subr.mxu0 0.0
    %219 = vmatpush1.msra.mxu0 0.0
    %220 = vmatprep.subr.mxu0 0.0
    %221 = vmatpush1.msra.mxu0 0.0
    %222 = vmatprep.subr.mxu0 0.0
    %223 = vmatpush1.msra.mxu0 0.0
    %224 = vmatprep.subr.mxu0 0.0
    %225 = vmatpush1.msra.mxu0 0.0
    %226 = vmatprep.subr.mxu0 0.0
    %227 = vmatpush1.msra.mxu0 0.0
    %228 = vmatprep.mubr.f32.mxu0 0.0
    %229 = vmatmul.mubr.f32.gmra.mrb[0].mxu0 %v156
    %v230 = vpop.f32.mrb[0].mxu0
    %v231 = vadd.f32 0.0, %v230
    %v232 = vpop.f32.mrb[0].mxu0
    %233 = vmatprep.mubr.f32.mxu0 0.0
    %234 = vmatmul.mubr.f32.gmra.mrb[0].mxu0 %v159
    %v235 = vpop.f32.mrb[0].mxu0
    %v236 = vadd.f32 0.0, %v235
    %v237 = vpop.f32.mrb[0].mxu0
    %238 = vdwg.mxu0
    %v239 = vpack.c.bf16 %v236, %v231
    %v240 = vld [vmem:[%s4] sm:$0xf]
    %v241 = vld [vmem:[%s4 + $0x4] sm:$0xf]
    %v242 = vld [vmem:[%s4 + $0x8] sm:$0xf]
    %v243 = vld [vmem:[%s4 + $0xc] sm:$0xf]
    %v244 = vld [vmem:[%s4 + $0x10] sm:$0xf]
    %v245 = vld [vmem:[%s4 + $0x14] sm:$0xf]
    %v246 = vld [vmem:[%s4 + $0x18] sm:$0xf]
    %v247 = vld [vmem:[%s4 + $0x1c] sm:$0xf]
    %v248 = vld [vmem:[%s4 + $0x20] sm:$0xf]
    %v249 = vld [vmem:[%s4 + $0x24] sm:$0xf]
    %v250 = vld [vmem:[%s4 + $0x28] sm:$0xf]
    %v251 = vld [vmem:[%s4 + $0x2c] sm:$0xf]
    %v252 = vld [vmem:[%s4 + $0x30] sm:$0xf]
    %v253 = vld [vmem:[%s4 + $0x34] sm:$0xf]
    %v254 = vld [vmem:[%s4 + $0x38] sm:$0xf]
    %v255 = vld [vmem:[%s4 + $0x3c] sm:$0xf]
    %v256 = vld [vmem:[%s6] sm:$0x1]
    %v258 = vlaneseq
    %v259 = vshrl.u32 %v258, 7
    %v260 = vsub.s32 0, %v259
    %v261 = vrot.slane %v256, %v260
    %v279 = vunpack.c.l.b16 %v240
    %v280 = vunpack.c.l.b16 %v241
    %v281 = vunpack.c.l.b16 %v242
    %v282 = vunpack.c.l.b16 %v243
    %v283 = vunpack.c.l.b16 %v244
    %v284 = vunpack.c.l.b16 %v245
    %v285 = vunpack.c.l.b16 %v246
    %v286 = vunpack.c.l.b16 %v247
    %v287 = vunpack.c.l.b16 %v248
    %v288 = vunpack.c.l.b16 %v249
    %v289 = vunpack.c.l.b16 %v250
    %v290 = vunpack.c.l.b16 %v251
    %v291 = vunpack.c.l.b16 %v252
    %v292 = vunpack.c.l.b16 %v253
    %v293 = vunpack.c.l.b16 %v254
    %v294 = vunpack.c.l.b16 %v255
    %v295 = vpack.c.b16 %v280, %v279
    %v296 = vpack.c.b16 %v282, %v281
    %v297 = vpack.c.b16 %v284, %v283
    %v298 = vpack.c.b16 %v286, %v285
    %v299 = vpack.c.b16 %v288, %v287
    %v300 = vpack.c.b16 %v290, %v289
    %v301 = vpack.c.b16 %v292, %v291
    %v302 = vpack.c.b16 %v294, %v293
    %311 = vmatprep.subr.bf16.mxu0 0
    %312 = vmatpush1.bf16.msra.mxu0 %v295
    %313 = vmatprep.subr.bf16.mxu0 0
    %314 = vmatpush1.bf16.msra.mxu0 %v296
    %315 = vmatprep.subr.bf16.mxu0 0
    %316 = vmatpush1.bf16.msra.mxu0 %v297
    %317 = vmatprep.subr.bf16.mxu0 0
    %318 = vmatpush1.bf16.msra.mxu0 %v298
    %319 = vmatprep.subr.bf16.mxu0 0
    %320 = vmatpush1.bf16.msra.mxu0 %v299
    %321 = vmatprep.subr.bf16.mxu0 0
    %322 = vmatpush1.bf16.msra.mxu0 %v300
    %323 = vmatprep.subr.bf16.mxu0 0
    %324 = vmatpush1.bf16.msra.mxu0 %v301
    %325 = vmatprep.subr.bf16.mxu0 0
    %326 = vmatpush1.bf16.msra.mxu0 %v302
    %327 = vmatprep.subr.bf16.mxu0 0
    %328 = vmatpush1.bf16.msra.mxu0 0
    %329 = vmatprep.subr.bf16.mxu0 0
    %330 = vmatpush1.bf16.msra.mxu0 0
    %331 = vmatprep.subr.bf16.mxu0 0
    %332 = vmatpush1.bf16.msra.mxu0 0
    %333 = vmatprep.subr.bf16.mxu0 0
    %334 = vmatpush1.bf16.msra.mxu0 0
    %335 = vmatprep.subr.bf16.mxu0 0
    %336 = vmatpush1.bf16.msra.mxu0 0
    %337 = vmatprep.subr.bf16.mxu0 0
    %338 = vmatpush1.bf16.msra.mxu0 0
    %339 = vmatprep.subr.bf16.mxu0 0
    %340 = vmatpush1.bf16.msra.mxu0 0
    %341 = vmatprep.subr.bf16.mxu0 0
    %342 = vmatpush1.bf16.msra.mxu0 0
    %343 = vmatprep.mubr.bf16.mxu0 0
    %344 = vmatmul.mubr.bf16.gmra.mrb[0].mxu0 %v239
    %v345 = vpop.f32.mrb[0].mxu0
    %v346 = vadd.f32 %v261, %v345
    %v347 = vpop.f32.mrb[0].mxu0
    %v348 = vpop.f32.mrb[0].mxu0
    %v349 = vadd.f32 %v261, %v348
    %v350 = vpop.f32.mrb[0].mxu0
    %351 = vdwg.mxu0
    %v352 = vld [vmem:[%s5] sm:$0xf]
    %v353 = vld [vmem:[%s5 + $0x4] sm:$0xf]
    %v354 = vld [vmem:[%s5 + $0x8] sm:$0xf]
    %v355 = vld [vmem:[%s5 + $0xc] sm:$0xf]
    %v356 = vld [vmem:[%s7] sm:$0xff]
    %v357 = vld [vmem:[%s7 + $0x8] sm:$0x3]
    %v362 = vunpack.c.l.b16 %v352
    %v363 = vunpack.c.l.b16 %v353
    %v364 = vunpack.c.l.b16 %v354
    %v365 = vunpack.c.l.b16 %v355
    %v366 = vpack.c.b16 %v363, %v362
    %v367 = vpack.c.b16 %v365, %v364
    %vm370 = vcmask 261120
    %v372 = vsel %vm370, 0, 0
    %374 = vmatprep.subr.bf16.mxu0 0
    %375 = vmatpush1.bf16.msra.mxu0 %v366
    %376 = vmatprep.subr.bf16.mxu0 0
    %377 = vmatpush1.bf16.msra.mxu0 %v367
    %378 = vmatprep.subr.bf16.mxu0 0
    %379 = vmatpush1.bf16.msra.mxu0 0
    %380 = vmatprep.subr.bf16.mxu0 0
    %381 = vmatpush1.bf16.msra.mxu0 0
    %382 = vmatprep.subr.bf16.mxu0 0
    %383 = vmatpush1.bf16.msra.mxu0 0
    %384 = vmatprep.subr.bf16.mxu0 0
    %385 = vmatpush1.bf16.msra.mxu0 0
    %386 = vmatprep.subr.bf16.mxu0 0
    %387 = vmatpush1.bf16.msra.mxu0 0
    %388 = vmatprep.subr.bf16.mxu0 0
    %389 = vmatpush1.bf16.msra.mxu0 0
    %390 = vmatprep.subr.bf16.mxu0 0
    %391 = vmatpush1.bf16.msra.mxu0 0
    %392 = vmatprep.subr.bf16.mxu0 0
    %393 = vmatpush1.bf16.msra.mxu0 0
    %394 = vmatprep.subr.bf16.mxu0 0
    %395 = vmatpush1.bf16.msra.mxu0 0
    %396 = vmatprep.subr.bf16.mxu0 0
    %397 = vmatpush1.bf16.msra.mxu0 0
    %398 = vmatprep.subr.bf16.mxu0 0
    %399 = vmatpush1.bf16.msra.mxu0 0
    %400 = vmatprep.subr.bf16.mxu0 0
    %401 = vmatpush1.bf16.msra.mxu0 0
    %402 = vmatprep.subr.bf16.mxu0 0
    %403 = vmatpush1.bf16.msra.mxu0 0
    %404 = vmatprep.subr.bf16.mxu0 0
    %405 = vmatpush1.bf16.msra.mxu0 0
    %406 = vmatprep.mubr.bf16.mxu0 0
    %407 = vmatmul.mubr.bf16.gmra.mrb[0].mxu0 %v372
    %v408 = vpop.f32.mrb[0].mxu0
    %v409 = vadd.f32 0.0, %v408
    %v410 = vpop.f32.mrb[0].mxu0
    %v411 = vpop.f32.mrb[0].mxu0
    %v412 = vpop.f32.mrb[0].mxu0
    %413 = vdwg.mxu0
    %v414 = vadd.f32 %v346, %v409
    %v415 = vxor.u32 %v414, 2147483648
    %v416 = vmul.f32 %v415, 1.442695
    %v417 = vpow.pop %v416
    %v418 = vadd.f32 %v417, 1.0
    %v419 = vrcp.pop %v418
    %v420 = vmul.f32 1.0, %v419
    %v421 = vtanh.pop %v414
    %v422 = vmul.f32 %v420, 0.0
    %424 = vrot.lane.b32.xlu0 %v421, 64
    %v425 = vpop.permute.xlu0 %424
    %v427 = vmul.f32 %v420, %v425
    %429 = vrot.lane.b32.xlu0 %v427, 32
    %v430 = vpop.permute.xlu0 %429
    %v432 = vadd.f32 %v422, %v430
    %v433 = vtanh.pop %v432
    %435 = vrot.lane.b32.xlu0 %v433, 64
    %v436 = vpop.permute.xlu0 %435
    %v438 = vmul.f32 %v420, %v436
    %vm439 = vcmp.gt.f32.partialorder %v356, 0.5
    %v440 = vsel %vm439, 1, 0
    %441 = vset.pattern.permute.xlu0 0
    %442 = vperm.xlu0 %441, %v440
    %v443 = vpop.permute.xlu0 %442
    %vm444 = vcmp.eq.s32.totalorder %v443, 1
    %v445 = vsel %vm444, %v432, 0.0
    %v446 = vsel %vm444, %v438, 0.0
    %v447 = vpack.c.bf16 %v446, %v446
    %449 = vrot.lane.b32.xlu0 %v447, 32
    %v450 = vpop.permute.xlu0 %449
    %v452 = vsel %vm370, %v450, 0
    %454 = vmatprep.subr.bf16.mxu0 0
    %455 = vmatpush1.bf16.msra.mxu0 %v366
    %456 = vmatprep.subr.bf16.mxu0 0
    %457 = vmatpush1.bf16.msra.mxu0 %v367
    %458 = vmatprep.subr.bf16.mxu0 0
    %459 = vmatpush1.bf16.msra.mxu0 0
    %460 = vmatprep.subr.bf16.mxu0 0
    %461 = vmatpush1.bf16.msra.mxu0 0
    %462 = vmatprep.subr.bf16.mxu0 0
    %463 = vmatpush1.bf16.msra.mxu0 0
    %464 = vmatprep.subr.bf16.mxu0 0
    %465 = vmatpush1.bf16.msra.mxu0 0
    %466 = vmatprep.subr.bf16.mxu0 0
    %467 = vmatpush1.bf16.msra.mxu0 0
    %468 = vmatprep.subr.bf16.mxu0 0
    %469 = vmatpush1.bf16.msra.mxu0 0
    %470 = vmatprep.subr.bf16.mxu0 0
    %471 = vmatpush1.bf16.msra.mxu0 0
    %472 = vmatprep.subr.bf16.mxu0 0
    %473 = vmatpush1.bf16.msra.mxu0 0
    %474 = vmatprep.subr.bf16.mxu0 0
    %475 = vmatpush1.bf16.msra.mxu0 0
    %476 = vmatprep.subr.bf16.mxu0 0
    %477 = vmatpush1.bf16.msra.mxu0 0
    %478 = vmatprep.subr.bf16.mxu0 0
    %479 = vmatpush1.bf16.msra.mxu0 0
    %480 = vmatprep.subr.bf16.mxu0 0
    %481 = vmatpush1.bf16.msra.mxu0 0
    %482 = vmatprep.subr.bf16.mxu0 0
    %483 = vmatpush1.bf16.msra.mxu0 0
    %484 = vmatprep.subr.bf16.mxu0 0
    %485 = vmatpush1.bf16.msra.mxu0 0
    %486 = vmatprep.mubr.bf16.mxu0 0
    %487 = vmatmul.mubr.bf16.gmra.mrb[0].mxu0 %v452
    %v488 = vpop.f32.mrb[0].mxu0
    %v489 = vadd.f32 0.0, %v488
    %v490 = vpop.f32.mrb[0].mxu0
    %v491 = vpop.f32.mrb[0].mxu0
    %v492 = vpop.f32.mrb[0].mxu0
    %493 = vdwg.mxu0
    %v495 = vrot.slane %v489, 6
    %v497 = vadd.f32 %v346, %v495
    %v498 = vxor.u32 %v497, 2147483648
    %v499 = vmul.f32 %v498, 1.442695
    %v500 = vpow.pop %v499
    %v501 = vadd.f32 %v500, 1.0
    %v502 = vrcp.pop %v501
    %v503 = vmul.f32 1.0, %v502
    %v504 = vtanh.pop %v497
    %v506 = vrot.slane %v445, 6
    %v508 = vmul.f32 %v503, %v506
    %510 = vrot.lane.b32.xlu0 %v504, 64
    %v511 = vpop.permute.xlu0 %510
    %v513 = vmul.f32 %v503, %v511
    %515 = vrot.lane.b32.xlu0 %v513, 32
    %v516 = vpop.permute.xlu0 %515
    %v518 = vadd.f32 %v508, %v516
    %v519 = vtanh.pop %v518
    %521 = vrot.lane.b32.xlu0 %v519, 64
    %v522 = vpop.permute.xlu0 %521
    %v524 = vmul.f32 %v503, %v522
    %v525 = vsel %vm444, %v518, %v506
    %v527 = vrot.slane %v446, 6
    %v529 = vsel %vm444, %v524, %v527
    %v530 = vpack.c.bf16 %v529, %v529
    %v532 = vrot.slane %v530, 1
    %533 = vrot.lane.b32.xlu0 %v532, 32
    %v534 = vpop.permute.xlu0 %533
    %v536 = vsel %vm370, %v534, 0
    %538 = vmatprep.subr.bf16.mxu0 0
    %539 = vmatpush1.bf16.msra.mxu0 %v366
    %540 = vmatprep.subr.bf16.mxu0 0
    %541 = vmatpush1.bf16.msra.mxu0 %v367
    %542 = vmatprep.subr.bf16.mxu0 0
    %543 = vmatpush1.bf16.msra.mxu0 0
    %544 = vmatprep.subr.bf16.mxu0 0
    %545 = vmatpush1.bf16.msra.mxu0 0
    %546 = vmatprep.subr.bf16.mxu0 0
    %547 = vmatpush1.bf16.msra.mxu0 0
    %548 = vmatprep.subr.bf16.mxu0 0
    %549 = vmatpush1.bf16.msra.mxu0 0
    %550 = vmatprep.subr.bf16.mxu0 0
    %551 = vmatpush1.bf16.msra.mxu0 0
    %552 = vmatprep.subr.bf16.mxu0 0
    %553 = vmatpush1.bf16.msra.mxu0 0
    %554 = vmatprep.subr.bf16.mxu0 0
    %555 = vmatpush1.bf16.msra.mxu0 0
    %556 = vmatprep.subr.bf16.mxu0 0
    %557 = vmatpush1.bf16.msra.mxu0 0
    %558 = vmatprep.subr.bf16.mxu0 0
    %559 = vmatpush1.bf16.msra.mxu0 0
    %560 = vmatprep.subr.bf16.mxu0 0
    %561 = vmatpush1.bf16.msra.mxu0 0
    %562 = vmatprep.subr.bf16.mxu0 0
    %563 = vmatpush1.bf16.msra.mxu0 0
    %564 = vmatprep.subr.bf16.mxu0 0
    %565 = vmatpush1.bf16.msra.mxu0 0
    %566 = vmatprep.subr.bf16.mxu0 0
    %567 = vmatpush1.bf16.msra.mxu0 0
    %568 = vmatprep.subr.bf16.mxu0 0
    %569 = vmatpush1.bf16.msra.mxu0 0
    %570 = vmatprep.mubr.bf16.mxu0 0
    %571 = vmatmul.mubr.bf16.gmra.mrb[0].mxu0 %v536
    %v572 = vpop.f32.mrb[0].mxu0
    %v573 = vadd.f32 0.0, %v572
    %v574 = vpop.f32.mrb[0].mxu0
    %v575 = vpop.f32.mrb[0].mxu0
    %v576 = vpop.f32.mrb[0].mxu0
    %577 = vdwg.mxu0
    %v579 = vrot.slane %v573, 4
    %v581 = vadd.f32 %v346, %v579
    %v582 = vxor.u32 %v581, 2147483648
    %v583 = vmul.f32 %v582, 1.442695
    %v584 = vpow.pop %v583
    %v585 = vadd.f32 %v584, 1.0
    %v586 = vrcp.pop %v585
    %v587 = vmul.f32 1.0, %v586
    %v588 = vtanh.pop %v581
    %v590 = vrot.slane %v525, 6
    %v592 = vmul.f32 %v587, %v590
    %594 = vrot.lane.b32.xlu0 %v588, 64
    %v595 = vpop.permute.xlu0 %594
    %v597 = vmul.f32 %v587, %v595
    %599 = vrot.lane.b32.xlu0 %v597, 32
    %v600 = vpop.permute.xlu0 %599
    %v602 = vadd.f32 %v592, %v600
    %v603 = vtanh.pop %v602
    %605 = vrot.lane.b32.xlu0 %v603, 64
    %v606 = vpop.permute.xlu0 %605
    %v608 = vmul.f32 %v587, %v606
    %v609 = vsel %vm444, %v602, %v590
    %v611 = vrot.slane %v529, 6
    %v613 = vsel %vm444, %v608, %v611
    %v614 = vpack.c.bf16 %v613, %v613
    %v616 = vrot.slane %v614, 2
    %617 = vrot.lane.b32.xlu0 %v616, 32
    %v618 = vpop.permute.xlu0 %617
    %v620 = vsel %vm370, %v618, 0
    %622 = vmatprep.subr.bf16.mxu0 0
    %623 = vmatpush1.bf16.msra.mxu0 %v366
    %624 = vmatprep.subr.bf16.mxu0 0
    %625 = vmatpush1.bf16.msra.mxu0 %v367
    %626 = vmatprep.subr.bf16.mxu0 0
    %627 = vmatpush1.bf16.msra.mxu0 0
    %628 = vmatprep.subr.bf16.mxu0 0
    %629 = vmatpush1.bf16.msra.mxu0 0
    %630 = vmatprep.subr.bf16.mxu0 0
    %631 = vmatpush1.bf16.msra.mxu0 0
    %632 = vmatprep.subr.bf16.mxu0 0
    %633 = vmatpush1.bf16.msra.mxu0 0
    %634 = vmatprep.subr.bf16.mxu0 0
    %635 = vmatpush1.bf16.msra.mxu0 0
    %636 = vmatprep.subr.bf16.mxu0 0
    %637 = vmatpush1.bf16.msra.mxu0 0
    %638 = vmatprep.subr.bf16.mxu0 0
    %639 = vmatpush1.bf16.msra.mxu0 0
    %640 = vmatprep.subr.bf16.mxu0 0
    %641 = vmatpush1.bf16.msra.mxu0 0
    %642 = vmatprep.subr.bf16.mxu0 0
    %643 = vmatpush1.bf16.msra.mxu0 0
    %644 = vmatprep.subr.bf16.mxu0 0
    %645 = vmatpush1.bf16.msra.mxu0 0
    %646 = vmatprep.subr.bf16.mxu0 0
    %647 = vmatpush1.bf16.msra.mxu0 0
    %648 = vmatprep.subr.bf16.mxu0 0
    %649 = vmatpush1.bf16.msra.mxu0 0
    %650 = vmatprep.subr.bf16.mxu0 0
    %651 = vmatpush1.bf16.msra.mxu0 0
    %652 = vmatprep.subr.bf16.mxu0 0
    %653 = vmatpush1.bf16.msra.mxu0 0
    %654 = vmatprep.mubr.bf16.mxu0 0
    %655 = vmatmul.mubr.bf16.gmra.mrb[0].mxu0 %v620
    %v656 = vpop.f32.mrb[0].mxu0
    %v657 = vadd.f32 0.0, %v656
    %v658 = vpop.f32.mrb[0].mxu0
    %v659 = vpop.f32.mrb[0].mxu0
    %v660 = vpop.f32.mrb[0].mxu0
    %661 = vdwg.mxu0
    %v663 = vrot.slane %v657, 2
    %v665 = vadd.f32 %v346, %v663
    %v666 = vxor.u32 %v665, 2147483648
    %v667 = vmul.f32 %v666, 1.442695
    %v668 = vpow.pop %v667
    %v669 = vadd.f32 %v668, 1.0
    %v670 = vrcp.pop %v669
    %v671 = vmul.f32 1.0, %v670
    %v672 = vtanh.pop %v665
    %v674 = vrot.slane %v609, 6
    %v676 = vmul.f32 %v671, %v674
    %678 = vrot.lane.b32.xlu0 %v672, 64
    %v679 = vpop.permute.xlu0 %678
    %v681 = vmul.f32 %v671, %v679
    %683 = vrot.lane.b32.xlu0 %v681, 32
    %v684 = vpop.permute.xlu0 %683
    %v686 = vadd.f32 %v676, %v684
    %v687 = vtanh.pop %v686
    %689 = vrot.lane.b32.xlu0 %v687, 64
    %v690 = vpop.permute.xlu0 %689
    %v692 = vmul.f32 %v671, %v690
    %v693 = vsel %vm444, %v686, %v674
    %v695 = vrot.slane %v613, 6
    %v697 = vsel %vm444, %v692, %v695
    %v698 = vpack.c.bf16 %v697, %v697
    %v700 = vrot.slane %v698, 3
    %701 = vrot.lane.b32.xlu0 %v700, 32
    %v702 = vpop.permute.xlu0 %701
    %v704 = vsel %vm370, %v702, 0
    %706 = vmatprep.subr.bf16.mxu0 0
    %707 = vmatpush1.bf16.msra.mxu0 %v366
    %708 = vmatprep.subr.bf16.mxu0 0
    %709 = vmatpush1.bf16.msra.mxu0 %v367
    %710 = vmatprep.subr.bf16.mxu0 0
    %711 = vmatpush1.bf16.msra.mxu0 0
    %712 = vmatprep.subr.bf16.mxu0 0
    %713 = vmatpush1.bf16.msra.mxu0 0
    %714 = vmatprep.subr.bf16.mxu0 0
    %715 = vmatpush1.bf16.msra.mxu0 0
    %716 = vmatprep.subr.bf16.mxu0 0
    %717 = vmatpush1.bf16.msra.mxu0 0
    %718 = vmatprep.subr.bf16.mxu0 0
    %719 = vmatpush1.bf16.msra.mxu0 0
    %720 = vmatprep.subr.bf16.mxu0 0
    %721 = vmatpush1.bf16.msra.mxu0 0
    %722 = vmatprep.subr.bf16.mxu0 0
    %723 = vmatpush1.bf16.msra.mxu0 0
    %724 = vmatprep.subr.bf16.mxu0 0
    %725 = vmatpush1.bf16.msra.mxu0 0
    %726 = vmatprep.subr.bf16.mxu0 0
    %727 = vmatpush1.bf16.msra.mxu0 0
    %728 = vmatprep.subr.bf16.mxu0 0
    %729 = vmatpush1.bf16.msra.mxu0 0
    %730 = vmatprep.subr.bf16.mxu0 0
    %731 = vmatpush1.bf16.msra.mxu0 0
    %732 = vmatprep.subr.bf16.mxu0 0
    %733 = vmatpush1.bf16.msra.mxu0 0
    %734 = vmatprep.subr.bf16.mxu0 0
    %735 = vmatpush1.bf16.msra.mxu0 0
    %736 = vmatprep.subr.bf16.mxu0 0
    %737 = vmatpush1.bf16.msra.mxu0 0
    %738 = vmatprep.mubr.bf16.mxu0 0
    %739 = vmatmul.mubr.bf16.gmra.mrb[0].mxu0 %v704
    %v740 = vpop.f32.mrb[0].mxu0
    %v741 = vadd.f32 0.0, %v740
    %v742 = vpop.f32.mrb[0].mxu0
    %v743 = vpop.f32.mrb[0].mxu0
    %v744 = vpop.f32.mrb[0].mxu0
    %745 = vdwg.mxu0
    %v746 = vadd.f32 %v349, %v741
    %v747 = vxor.u32 %v746, 2147483648
    %v748 = vmul.f32 %v747, 1.442695
    %v749 = vpow.pop %v748
    %v750 = vadd.f32 %v749, 1.0
    %v751 = vrcp.pop %v750
    %v752 = vmul.f32 1.0, %v751
    %v753 = vtanh.pop %v746
    %v755 = vrot.slane %v693, 6
    %v757 = vmul.f32 %v752, %v755
    %759 = vrot.lane.b32.xlu0 %v753, 64
    %v760 = vpop.permute.xlu0 %759
    %v762 = vmul.f32 %v752, %v760
    %764 = vrot.lane.b32.xlu0 %v762, 32
    %v765 = vpop.permute.xlu0 %764
    %v767 = vadd.f32 %v757, %v765
    %v768 = vtanh.pop %v767
    %770 = vrot.lane.b32.xlu0 %v768, 64
    %v771 = vpop.permute.xlu0 %770
    %v773 = vmul.f32 %v752, %v771
    %vm774 = vcmp.gt.f32.partialorder %v357, 0.5
    %v775 = vsel %vm774, 1, 0
    %776 = vset.pattern.permute.xlu0 0
    %777 = vperm.xlu0 %776, %v775
    %v778 = vpop.permute.xlu0 %777
    %vm779 = vcmp.eq.s32.totalorder %v778, 1
    %v781 = vrot.slane %v697, 6
    %v783 = vsel %vm779, %v773, %v781
    %785 = vrot.lane.b32.xlu0 %v783, 32
    %v786 = vpop.permute.xlu0 %785
    %vm788 = vcmask 254976
    %789 = vst.msk [vmem:[#allocation2] sm:$0x3] %vm788, %v786
    // Predicated region
    $region34: #{model_forward.1} parent=1 // pred_check
      _
    $region35: #{model_forward.1} parent=1 // pred_check_branch
      %791 = sbr.rel (0) target = $region37
    $region36: #{model_forward.1} parent=1 // pred_region
      %s793 = ssub.s32 32, 32
      %794 = vsyncadd [#allocation3], %s793
      %s796 = sshll.u32 [#allocation2], 4
      %s797 = int_to_ptr.vmem [resolvable:$true] %s796
      %799 = dma.vmem_to_hbm [thread:$0]  %s797, 32, %s8, [#allocation3]
    $region37: #{model_forward.1} parent=1 // pred_fallthru
      _
    // Predicated region
    $region38: #{model_forward.1} parent=1 // pred_check
      _
    $region39: #{model_forward.1} parent=1 // pred_check_branch
      %801 = sbr.rel (0) target = $region41
    $region40: #{model_forward.1} parent=1 // pred_region
      %802 = dma.done [#allocation3], 32
    $region41: #{model_forward.1} parent=1 // pred_fallthru
      _
    %803 = vsyncpa [#allocation3], 1

</llo_original>
